<compile_context>
chip_gen: v7x
topology: tpu7x:2x2x1
jax: 0.10.0
libtpu: 0.0.40
codegen_flags: <defaults>
</compile_context>

<pallas_src>
import functools

import jax
import jax.numpy as jnp
from jax.experimental import pallas as pl
from jax.experimental.pallas import tpu as pltpu

EPS = 1e-5

# Below this many payload bytes the pallas_call launch + per-step overhead
# dominates and prevents XLA fusion with neighbours -> use the pure-JAX path.
_PALLAS_MIN_BYTES = 256 * 1024


# ----------------------------------------------------------------------------
# Pallas kernels
# ----------------------------------------------------------------------------
def _ln_kernel(x_ref, w_ref, o_ref):
    # x_ref: (1, C, T)   w_ref: (1, C, 1)   o_ref: (1, C, T)
    x = x_ref[...].astype(jnp.float32)
    w = w_ref[...].astype(jnp.float32)
    # Two-pass biased variance over the channel (sublane) axis, per lane.
    m = jnp.mean(x, axis=1, keepdims=True)            # (1, 1, T)
    d = x - m
    var = jnp.mean(d * d, axis=1, keepdims=True)      # (1, 1, T)
    inv = jax.lax.rsqrt(var + EPS)                    # EUP slot (free-ish)
    # BiasFree LN: mean is only used for the variance, not subtracted.
    o_ref[...] = (x * (inv * w)).astype(o_ref.dtype)


def _ln_proj_kernel(x_ref, w_ref, p_ref, o_ref):
    # x_ref: (1, C, T)  w_ref: (1, C, 1)  p_ref: (Cout, C)  o_ref: (1, Cout, T)
    x = x_ref[...].astype(jnp.float32)
    w = w_ref[...].astype(jnp.float32)
    m = jnp.mean(x, axis=1, keepdims=True)
    d = x - m
    var = jnp.mean(d * d, axis=1, keepdims=True)
    inv = jax.lax.rsqrt(var + EPS)
    xn = x * (inv * w)                                # (1, C, T) normalized
    # Fused 1x1 conv: (Cout, C) @ (C, T) on the MXU. Contraction is over C
    # only, so each output lane depends only on its own input lane -> garbage
    # in OOB lanes of a partial last tile stays in dead lanes (masked store).
    p = p_ref[...].astype(jnp.float32)
    out = jnp.dot(p, xn[0], preferred_element_type=jnp.float32)   # (Cout, T)
    o_ref[...] = out[None].astype(o_ref.dtype)


# ----------------------------------------------------------------------------
# Tile sizing (generation-aware, byte-gated only)
# ----------------------------------------------------------------------------
def _sublane_pad(c, itemsize):
    sub = 8 * (4 // itemsize)                # 8 rows/vreg f32, 16 bf16
    return -(-c // sub) * sub


def _vmem_budget_bytes():
    """Total VMEM budget for this kernel's working set (stays under the
    per-generation default scoped VMEM limit, no vmem_limit override)."""
    kind = ""
    try:
        kind = jax.devices()[0].device_kind.lower()
    except Exception:  # pragma: no cover - defensive
        pass
    if "v5" in kind and ("lite" in kind or "v5e" in kind):
        return 12 << 20        # v5e: only 16 MiB default scoped VMEM
    if "v6" in kind or "v7" in kind or "7x" in kind:
        return 24 << 20        # v6e / v7x: 32 MiB default scoped VMEM
    return 12 << 20            # unknown -> conservative


def _lane_tile(hw, c_in, c_out, in_isz, out_isz):
    """Pick lane-axis tile T (multiple of 128, or the full HW) from bytes."""
    cin_p = _sublane_pad(c_in, in_isz)
    cout_p = _sublane_pad(c_out, out_isz)
    # Per lane column: double-buffered input + output blocks, plus the f32
    # working copies the body materializes (x / x_norm and projected result).
    per_lane = (2 * cin_p * in_isz + 2 * cout_p * out_isz
                + 2 * cin_p * 4 + cout_p * 4)
    t = (_vmem_budget_bytes() // per_lane) // 128 * 128
    t = max(128, t)
    if hw <= t:
        return hw, 1                          # single full-width lane-dense block
    return t, pl.cdiv(hw, t)


# ----------------------------------------------------------------------------
# Pallas wrappers
# ----------------------------------------------------------------------------
def biasfree_layernorm_nchw(x, weight, *, lane_tile=None,
                            min_bytes=_PALLAS_MIN_BYTES):
    """x: (B, C, H, W), weight: (C,). BiasFree LayerNorm over channels."""
    B, C, H, W = x.shape
    HW = H * W
    isz = x.dtype.itemsize
    if C * HW * isz < min_bytes:
        return reference_biasfree_layernorm_nchw(x, weight)

    x3 = x.reshape(B, C, HW)
    w3 = weight.reshape(1, C, 1).astype(x.dtype)
    if lane_tile is None:
        t, n_hw = _lane_tile(HW, C, C, isz, isz)
    else:
        t, n_hw = lane_tile, pl.cdiv(HW, lane_tile)

    cost = pl.CostEstimate(
        flops=6 * B * C * HW,
        transcendentals=B * HW,
        bytes_accessed=2 * B * C * HW * isz + C * isz)

    out = pl.pallas_call(
        _ln_kernel,
        out_shape=jax.ShapeDtypeStruct((B, C, HW), x.dtype),
        grid_spec=pltpu.PrefetchScalarGridSpec(
            num_scalar_prefetch=0,
            grid=(B, n_hw),
            in_specs=[
                pl.BlockSpec((1, C, t), lambda b, s: (b, 0, s)),
                # constant index_map -> DMA'd once, stays resident
                pl.BlockSpec((1, C, 1), lambda b, s: (0, 0, 0)),
            ],
            out_specs=pl.BlockSpec((1, C, t), lambda b, s: (b, 0, s)),
        ),
        compiler_params=pltpu.CompilerParams(
            dimension_semantics=("parallel", "parallel")),
        cost_estimate=cost,
    )(x3, w3)
    return out.reshape(B, C, H, W)


def layernorm_conv1x1_nchw(x, ln_weight, proj_weight, *, lane_tile=None,
                           min_bytes=_PALLAS_MIN_BYTES):
    """Fused BiasFree LayerNorm (over C) + 1x1 conv (C -> Cout), NCHW."""
    B, C, H, W = x.shape
    Cout = proj_weight.shape[0]
    HW = H * W
    isz = x.dtype.itemsize
    if C * HW * isz < min_bytes:
        return _conv1x1(reference_biasfree_layernorm_nchw(x, ln_weight),
                        proj_weight)

    x3 = x.reshape(B, C, HW)
    w3 = ln_weight.reshape(1, C, 1).astype(x.dtype)
    p2 = proj_weight.astype(x.dtype)
    if lane_tile is None:
        t, n_hw = _lane_tile(HW, C, Cout, isz, isz)
    else:
        t, n_hw = lane_tile, pl.cdiv(HW, lane_tile)

    cost = pl.CostEstimate(
        flops=6 * B * C * HW + 2 * B * Cout * C * HW,
        transcendentals=B * HW,
        bytes_accessed=(B * C * HW + B * Cout * HW) * isz
                       + C * isz + Cout * C * isz)

    out = pl.pallas_call(
        _ln_proj_kernel,
        out_shape=jax.ShapeDtypeStruct((B, Cout, HW), x.dtype),
        grid_spec=pltpu.PrefetchScalarGridSpec(
            num_scalar_prefetch=0,
            grid=(B, n_hw),
            in_specs=[
                pl.BlockSpec((1, C, t), lambda b, s: (b, 0, s)),
                pl.BlockSpec((1, C, 1), lambda b, s: (0, 0, 0)),     # resident
                pl.BlockSpec((Cout, C), lambda b, s: (0, 0)),        # resident
            ],
            out_specs=pl.BlockSpec((1, Cout, t), lambda b, s: (b, 0, s)),
        ),
        compiler_params=pltpu.CompilerParams(
            dimension_semantics=("parallel", "parallel")),
        cost_estimate=cost,
    )(x3, w3, p2)
    return out.reshape(B, Cout, H, W)


def reference_biasfree_layernorm_nchw(x, weight):
    # Pure-JAX reference mirroring the PyTorch BiasFree_LayerNorm exactly.
    B, C, H, W = x.shape
    x3 = jnp.transpose(x, (0, 2, 3, 1)).reshape(B, H * W, C)   # b (h w) c
    sigma = jnp.var(x3, axis=-1, keepdims=True)                # unbiased=False
    y3 = x3 / jnp.sqrt(sigma + EPS) * weight
    return jnp.transpose(y3.reshape(B, H, W, C), (0, 3, 1, 2))


# ----------------------------------------------------------------------------
# DMFA glue (plain JAX / XLA)
# ----------------------------------------------------------------------------
def _conv1x1(x, w):                       # x: (B,Cin,H,W), w: (Cout,Cin)
    return jnp.einsum("oi,bihw->bohw", w, x)


def _dwconv3x3(x, w):                     # w: (C, 1, 3, 3), groups=C, no bias
    return jax.lax.conv_general_dilated(
        x, w, window_strides=(1, 1), padding=((1, 1), (1, 1)),
        dimension_numbers=("NCHW", "OIHW", "NCHW"),
        feature_group_count=x.shape[1])


def _l2_normalize(t, eps=1e-12):          # torch.nn.functional.normalize(dim=-1)
    n = jnp.sqrt(jnp.sum(t * t, axis=-1, keepdims=True))
    return t / jnp.maximum(n, eps)


def _attention_core(p, q, kv, num_heads, shape):
    B, C, H, W = shape
    k, v = jnp.split(kv, 2, axis=1)

    def to_heads(t):                      # 'b (head c) h w -> b head c (h w)'
        return t.reshape(B, num_heads, C // num_heads, H * W)

    qh = _l2_normalize(to_heads(q))
    kh = _l2_normalize(to_heads(k))
    vh = to_heads(v)
    attn = jnp.einsum("bhcd,bhed->bhce", qh, kh) * p["temperature"][None]
    attn = jax.nn.softmax(attn, axis=-1)
    out = jnp.einsum("bhce,bhed->bhcd", attn, vh).reshape(B, C, H, W)
    return _conv1x1(out, p["proj_w"])


def dmfa_forward(params, x, y, num_heads=4, *, min_bytes=_PALLAS_MIN_BYTES):
    """Pallas path: each LayerNorm is fused with the following 1x1 conv."""
    a, f = params["attn"], params["ffn"]
    ln_proj = functools.partial(layernorm_conv1x1_nchw, min_bytes=min_bytes)
    # out1 = y + x + Attention(norm1(x), norm2(y))
    kv = _dwconv3x3(ln_proj(x, params["norm1_w"], a["kv_w"]), a["kv_dw_w"])
    q = _dwconv3x3(ln_proj(y, params["norm2_w"], a["q_w"]), a["q_dw_w"])
    out1 = y + x + _attention_core(a, q, kv, num_heads, x.shape)
    # out = out1 + FFN(norm2(out1))  (the PyTorch module reassigns self.norm2,
    # so the SAME norm2 weights normalize both y and out1 -- preserved here).
    h = _dwconv3x3(ln_proj(out1, params["norm2_w"], f["in_w"]), f["dw_w"])
    x1, x2 = jnp.split(h, 2, axis=1)
    g = jax.nn.gelu(x1, approximate=False) * x2   # exact GELU (matches F.gelu)
    return out1 + _conv1x1(g, f["out_w"])


def dmfa_forward_ref(params, x, y, num_heads=4):
    """Pure-JAX reference (un-fused), mirrors the PyTorch module."""
    a, f = params["attn"], params["ffn"]
    n1x = reference_biasfree_layernorm_nchw(x, params["norm1_w"])
    n2y = reference_biasfree_layernorm_nchw(y, params["norm2_w"])
    kv = _dwconv3x3(_conv1x1(n1x, a["kv_w"]), a["kv_dw_w"])
    q = _dwconv3x3(_conv1x1(n2y, a["q_w"]), a["q_dw_w"])
    out1 = y + x + _attention_core(a, q, kv, num_heads, x.shape)
    n2o = reference_biasfree_layernorm_nchw(out1, params["norm2_w"])
    h = _dwconv3x3(_conv1x1(n2o, f["in_w"]), f["dw_w"])
    x1, x2 = jnp.split(h, 2, axis=1)
    g = jax.nn.gelu(x1, approximate=False) * x2
    return out1 + _conv1x1(g, f["out_w"])


def init_params(key, dim, num_heads, ratio):
    hidden = int(dim * ratio)
    ks = jax.random.split(key, 8)

    def conv_w(k, c_out, c_in, ksize=1):
        fan_in = c_in * ksize * ksize
        shape = (c_out, c_in) if ksize == 1 else (c_out, c_in, ksize, ksize)
        return jax.random.normal(k, shape, jnp.float32) * (fan_in ** -0.5)

    return {
        "norm1_w": jnp.ones((dim,), jnp.float32),
        "norm2_w": jnp.ones((dim,), jnp.float32),
        "attn": {
            "temperature": jnp.ones((num_heads, 1, 1), jnp.float32),
            "kv_w": conv_w(ks[0], 2 * dim, dim),
            "kv_dw_w": conv_w(ks[1], 2 * dim, 1, 3),
            "q_w": conv_w(ks[2], dim, dim),
            "q_dw_w": conv_w(ks[3], dim, 1, 3),
            "proj_w": conv_w(ks[4], dim, dim),
        },
        "ffn": {
            "in_w": conv_w(ks[5], 2 * hidden, dim),
            "dw_w": conv_w(ks[6], 2 * hidden, 1, 3),
            "out_w": conv_w(ks[7], dim, hidden),
        },
    }


if __name__ == "__main__":
    key = jax.random.PRNGKey(0)
    kx, ky, kp, k1, k2, k3, k4 = jax.random.split(key, 7)

    B, C, H, W = 2, 4, 16, 16
    num_heads, ratio = 4, 2.66

    x = jax.random.normal(kx, (B, C, H, W), dtype=jnp.float32)
    y = jax.random.normal(ky, (B, C, H, W), dtype=jnp.float32)
    params = init_params(kp, C, num_heads, ratio)

    # 1) Pallas LN kernel (forced) -- small single-tile shape.
    out_ln = jax.block_until_ready(
        biasfree_layernorm_nchw(x, params["norm1_w"], min_bytes=0))
    ref_ln = reference_biasfree_layernorm_nchw(x, params["norm1_w"])
    assert out_ln.shape == (B, C, H, W)
    assert jnp.allclose(out_ln, ref_ln, atol=1e-5, rtol=1e-5)

    # 2) Pallas LN kernel -- multiple lane tiles with a partial last tile.
    xt = jax.random.normal(k1, (1, 5, 72, 60), dtype=jnp.float32)  # HW = 4320
    wt = jax.random.normal(k2, (5,), dtype=jnp.float32)
    out_t = jax.block_until_ready(
        biasfree_layernorm_nchw(xt, wt, lane_tile=2048, min_bytes=0))
    ref_t = reference_biasfree_layernorm_nchw(xt, wt)
    assert jnp.allclose(out_t, ref_t, atol=1e-5, rtol=1e-5)

    # 3) Fused LN + 1x1 projection kernel -- multi-tile, Cout != Cin.
    xf = jax.random.normal(k3, (1, 8, 50, 60), dtype=jnp.float32)  # HW = 3000
    wf = jax.random.normal(k4, (8,), dtype=jnp.float32)
    pf = jax.random.normal(k1, (16, 8), dtype=jnp.float32) * 0.3
    out_f = jax.block_until_ready(
        layernorm_conv1x1_nchw(xf, wf, pf, lane_tile=1024, min_bytes=0))
    ref_f = _conv1x1(reference_biasfree_layernorm_nchw(xf, wf), pf)
    assert jnp.allclose(out_f, ref_f, atol=1e-4, rtol=1e-4)

    # 3b) Auto-sized (byte-gated) path on a shape big enough to use Pallas.
    xa = jax.random.normal(k2, (1, 8, 128, 128), dtype=jnp.float32)
    out_a = jax.block_until_ready(layernorm_conv1x1_nchw(xa, wf, pf))
    ref_a = _conv1x1(reference_biasfree_layernorm_nchw(xa, wf), pf)
    assert jnp.allclose(out_a, ref_a, atol=1e-4, rtol=1e-4)

    # 4) Full DMFA forward: fused-Pallas path (forced) vs pure-JAX reference.
    fwd = jax.jit(lambda p, a, b: dmfa_forward(p, a, b, num_heads, min_bytes=0))
    fwd_ref = jax.jit(lambda p, a, b: dmfa_forward_ref(p, a, b, num_heads))
    out = jax.block_until_ready(fwd(params, x, y))
    ref = jax.block_until_ready(fwd_ref(params, x, y))
    assert out.shape == (B, C, H, W)
    assert jnp.allclose(out, ref, atol=1e-4, rtol=1e-4)

    # 5) Auto-fallback variant (small shapes -> pure-JAX LN) also matches.
    out_auto = jax.block_until_ready(
        jax.jit(lambda p, a, b: dmfa_forward(p, a, b, num_heads))(params, x, y))
    assert jnp.allclose(out_auto, ref, atol=1e-4, rtol=1e-4)

    print("KERNEL_OK")
</pallas_src>

<mosaic_0001>
module attributes {stable_mosaic.version = 11 : i64} {
  func.func @_ln_kernel(%arg0: i32, %arg1: i32, %arg2: memref<1x4x256xf32, #tpu.memory_space<vmem>>, %arg3: memref<1x4x1xf32, #tpu.memory_space<vmem>>, %arg4: memref<1x4x256xf32, #tpu.memory_space<vmem>>) attributes {dimension_semantics = [#tpu.dimension_semantics<parallel>, #tpu.dimension_semantics<parallel>], iteration_bounds = array<i64: 2, 1>, scalar_prefetch = 0 : i64, scratch_operands = 0 : i64, tpu.core_type = #tpu.core_type<tc>, window_params = [{transform_indices = @transform_0, window_bounds = array<i64: 1, 4, 256>}, {pipeline_mode = #tpu.pipeline_mode<synchronous>, transform_indices = @transform_1, window_bounds = array<i64: 1, 4, 1>}, {transform_indices = @transform_2, window_bounds = array<i64: 1, 4, 256>}]} {
    %c0 = arith.constant 0 : index
    %c0_0 = arith.constant 0 : index
    %c0_1 = arith.constant 0 : index
    %0 = vector.load %arg2[%c0, %c0_0, %c0_1] : memref<1x4x256xf32, #tpu.memory_space<vmem>>, vector<1x4x256xf32>
    %c0_2 = arith.constant 0 : index
    %c0_3 = arith.constant 0 : index
    %c0_4 = arith.constant 0 : index
    %1 = vector.load %arg3[%c0_2, %c0_3, %c0_4] : memref<1x4x1xf32, #tpu.memory_space<vmem>>, vector<1x4x1xf32>
    %cst = arith.constant dense<0.000000e+00> : vector<1x256xf32>
    %2 = vector.multi_reduction <add>, %0, %cst [1] : vector<1x4x256xf32> to vector<1x256xf32>
    %3 = vector.shape_cast %2 : vector<1x256xf32> to vector<1x1x256xf32>
    %cst_5 = arith.constant 4.000000e+00 : f32
    %4 = vector.broadcast %cst_5 : f32 to vector<1x1x256xf32>
    %5 = arith.divf %3, %4 : vector<1x1x256xf32>
    %6 = vector.broadcast %5 : vector<1x1x256xf32> to vector<1x4x256xf32>
    %7 = arith.subf %0, %6 : vector<1x4x256xf32>
    %8 = arith.mulf %7, %7 : vector<1x4x256xf32>
    %cst_6 = arith.constant dense<0.000000e+00> : vector<1x256xf32>
    %9 = vector.multi_reduction <add>, %8, %cst_6 [1] : vector<1x4x256xf32> to vector<1x256xf32>
    %10 = vector.shape_cast %9 : vector<1x256xf32> to vector<1x1x256xf32>
    %cst_7 = arith.constant 4.000000e+00 : f32
    %11 = vector.broadcast %cst_7 : f32 to vector<1x1x256xf32>
    %12 = arith.divf %10, %11 : vector<1x1x256xf32>
    %cst_8 = arith.constant 9.99999974E-6 : f32
    %13 = vector.broadcast %cst_8 : f32 to vector<1x1x256xf32>
    %14 = arith.addf %12, %13 : vector<1x1x256xf32>
    %15 = math.rsqrt %14 : vector<1x1x256xf32>
    %16 = vector.broadcast %15 : vector<1x1x256xf32> to vector<1x4x256xf32>
    %17 = vector.broadcast %1 : vector<1x4x1xf32> to vector<1x4x256xf32>
    %18 = arith.mulf %16, %17 : vector<1x4x256xf32>
    %19 = arith.mulf %0, %18 : vector<1x4x256xf32>
    %c0_9 = arith.constant 0 : index
    %c0_10 = arith.constant 0 : index
    %c0_11 = arith.constant 0 : index
    %20 = vector.load %arg4[%c0_9, %c0_10, %c0_11] : memref<1x4x256xf32, #tpu.memory_space<vmem>>, vector<1x4x256xf32>
    tpu.vector_store %arg4[%c0_9, %c0_10, %c0_11], %19 {strides = array<i32>} : memref<1x4x256xf32, #tpu.memory_space<vmem>>, vector<1x4x256xf32>,
    return
  }
  func.func @transform_0(%arg0: i32, %arg1: i32) -> (i32, i32, i32) {
    %c0_i32 = arith.constant 0 : i32
    %c0_i32_0 = arith.constant 0 : i32
    return %arg0, %c0_i32, %arg1 : i32, i32, i32
  }
  func.func @transform_1(%arg0: i32, %arg1: i32) -> (i32, i32, i32) {
    %c0_i32 = arith.constant 0 : i32
    %c0_i32_0 = arith.constant 0 : i32
    %c0_i32_1 = arith.constant 0 : i32
    %c0_i32_2 = arith.constant 0 : i32
    return %c0_i32, %c0_i32_0, %c0_i32_1 : i32, i32, i32
  }
  func.func @transform_2(%arg0: i32, %arg1: i32) -> (i32, i32, i32) {
    %c0_i32 = arith.constant 0 : i32
    %c0_i32_0 = arith.constant 0 : i32
    return %arg0, %c0_i32, %arg1 : i32, i32, i32
  }
}

</mosaic_0001>

<llo_original>
// kernel: tpu_custom_call.1
$region0: #{tpu_custom_call.1}
  #allocation0 [shape = 'u32[]', space=smem, size = 0x4, offset = 0x4, fixed_abs, tag = 'smem constant byte address 0x4 - core index']
  #allocation1 [shape = 'u32[144,128]{1,0:T(1,128)}', space=vmem, size = 0x12000, scoped, tag = 'internal scratch']
  %s0 = inlined_call_operand.hbm [shape: f32[2,4,256], index: 0, kind: input, shape index: {}]
  %s1 = inlined_call_operand.vmem [shape: f32[1,4,1], index: 1, kind: input, shape index: {}]
  %s2 = inlined_call_operand.hbm [shape: f32[2,4,256], index: 2, kind: output, shape index: {}]
  %s3 = sld [smem:[#allocation0]]
  $region45: #{tpu_custom_call.1} parent=0
    _
  %s5 = ssub.s32 1, %s3
  %s6 = scalar_select 0, %s5, %s3
  $region1: #{tpu_custom_call.1} parent=0
    #allocation2 [shape = 'u8[8192]{0}', space=vmem, size = 0x2000, scoped, tag = 'input window, operand 0']
    #allocation3 [shape = 's32[2]{0}', space=sflag, size = 0x8, scoped, tag = 'scoped memory for tpu_custom_call.1']
    #allocation4 [shape = 's32[2]{0}', space=sflag, size = 0x8, scoped, tag = 'scoped memory for tpu_custom_call.1']
    #allocation5 [shape = 'u8[8192]{0}', space=vmem, size = 0x2000, scoped, tag = 'output window, operand 0']
    %7 = vsyncpa [#allocation3], 0
    %s8 = scalar_lea.sflag [#allocation3], 1
    %9 = vsyncpa %s8, 0
    %10 = vsyncpa [#allocation4], 0
    %s11 = scalar_lea.sflag [#allocation4], 1
    %12 = vsyncpa %s11, 0
    loop: start=0, step=1, limit=4
    $region2: #{tpu_custom_call.1} parent=1 // loop_pre_header
      _
    $region3: #{tpu_custom_call.1} parent=1 // loop_header
      %s14 = sphi 0, %s18
      %p15 = scmp.ge.s32.totalorder %s14, 4
      %s21 = sphi 0, %s33
      %s22 = sphi 0, %s29
      %s23 = sphi 0, %s21
      %s24 = sphi 0, %s22
      %s25 = sphi 0, %s23
      %s26 = sphi 0, %s24
      %s38 = sphi 0, %s40
      %s41 = sphi 0, %s38
      %s42 = sphi 0, %s41
      %s58 = sphi 0, %s42
      %s62 = sphi 0, %s62
      %s64 = sphi 0, %s62
      %s65 = sphi 0, %s64
      %s79 = sphi 0, %s65
      %s87 = sphi 0, %s89
      %s90 = sphi 0, %s87
      %s91 = sphi 0, %s90
      %s107 = sphi 0, %s91
    $region4: #{tpu_custom_call.1} parent=1 // loop_header_branch
      %17 = sbr.rel (%p15) target = $region8
    $region5: #{tpu_custom_call.1} parent=1 // loop_body
      %s19 = ssub.s32 %s14, 1
      %s20 = ssub.s32 %s14, 2
      %s27 = sadd.s32 1, %s22
      %p28 = scmp.ge.s32.totalorder %s27, 1
      %s29 = scalar_select %p28, 0, %s27
      %s30 = sadd.s32 1, %s21
      %s31 = scalar_select %p28, %s30, %s21
      %p32 = scmp.ge.s32.totalorder %s31, 2
      %s33 = scalar_select %p32, 0, %s31
      %s34 = ssub.s32 %s21, %s33
      %s35 = ssub.s32 %s22, %s29
      %s36 = sor.u32 %s34, %s35
      %p37 = scmp.eq.s32.totalorder %s36, 0
      %s39 = sadd.s32 %s38, 1
      %s40 = scalar_select %p37, %s38, %s39
      %p43 = pneg %p37
      %p44 = scmp.eq.s32.totalorder %s14, 1
      %p45 = por %p43, %p44
      %p46 = scmp.ne.s32.totalorder %s38, %s41
      %p47 = scmp.eq.s32.totalorder %s14, 0
      %p48 = por %p46, %p47
      %p49 = scmp.ne.s32.totalorder %s38, %s41
      %p50 = scmp.eq.s32.totalorder %s19, 1
      %p51 = por %p49, %p50
      %p52 = scmp.ne.s32.totalorder %s41, %s42
      %p53 = scmp.eq.s32.totalorder %s19, 0
      %p54 = por %p52, %p53
      %p55 = scmp.ne.s32.totalorder %s41, %s42
      %p56 = scmp.eq.s32.totalorder %s20, 1
      %p57 = por %p55, %p56
      %p59 = scmp.ne.s32.totalorder %s42, %s58
      %p60 = scmp.eq.s32.totalorder %s20, 0
      %p61 = por %p59, %p60
      %s63 = sadd.s32 %s62, 1
      %p66 = scmp.eq.s32.totalorder %s14, 1
      %p67 = scmp.ne.s32.totalorder %s62, %s64
      %p68 = scmp.eq.s32.totalorder %s14, 0
      %p69 = por %p67, %p68
      %p70 = scmp.ne.s32.totalorder %s62, %s64
      %p71 = scmp.eq.s32.totalorder %s19, 1
      %p72 = por %p70, %p71
      %p73 = scmp.ne.s32.totalorder %s64, %s65
      %p74 = scmp.eq.s32.totalorder %s19, 0
      %p75 = por %p73, %p74
      %p76 = scmp.ne.s32.totalorder %s64, %s65
      %p77 = scmp.eq.s32.totalorder %s20, 1
      %p78 = por %p76, %p77
      %p80 = scmp.ne.s32.totalorder %s65, %s79
      %p81 = scmp.eq.s32.totalorder %s20, 0
      %p82 = por %p80, %p81
      %s83 = ssub.s32 %s21, %s33
      %s84 = ssub.s32 %s22, %s29
      %s85 = sor.u32 %s83, %s84
      %p86 = scmp.eq.s32.totalorder %s85, 0
      %s88 = sadd.s32 %s87, 1
      %s89 = scalar_select %p86, %s87, %s88
      %p92 = pneg %p86
      %p93 = scmp.eq.s32.totalorder %s14, 1
      %p94 = por %p92, %p93
      %p95 = scmp.ne.s32.totalorder %s87, %s90
      %p96 = scmp.eq.s32.totalorder %s14, 0
      %p97 = por %p95, %p96
      %p98 = scmp.ne.s32.totalorder %s87, %s90
      %p99 = scmp.eq.s32.totalorder %s19, 1
      %p100 = por %p98, %p99
      %p101 = scmp.ne.s32.totalorder %s90, %s91
      %p102 = scmp.eq.s32.totalorder %s19, 0
      %p103 = por %p101, %p102
      %p104 = scmp.ne.s32.totalorder %s90, %s91
      %p105 = scmp.eq.s32.totalorder %s20, 1
      %p106 = por %p104, %p105
      %p108 = scmp.ne.s32.totalorder %s91, %s107
      %p109 = scmp.eq.s32.totalorder %s20, 0
      %p110 = por %p108, %p109
      %p111 = scmp.le.s32.totalorder 1, %s14
      %p112 = scmp.lt.s32.totalorder %s14, 3
      %p113 = pnand %p111, %p112
      %p114 = pneg %p113
      // Predicated region
      $region9: #{tpu_custom_call.1} parent=5 // pred_check
        _
      $region10: #{tpu_custom_call.1} parent=5 // pred_check_branch
        %116 = sbr.rel (%p113) target = $region12
      $region11: #{tpu_custom_call.1} parent=5 // pred_region
        %s117 = ssub.s32 %s14, 1
        // Predicated region
        $region13: #{tpu_custom_call.1} parent=11 // pred_check
          %p118 = pneg %p75
        $region14: #{tpu_custom_call.1} parent=11 // pred_check_branch
          %120 = sbr.rel (%p118) target = $region16
        $region15: #{tpu_custom_call.1} parent=11 // pred_region
          _
        $region16: #{tpu_custom_call.1} parent=11 // pred_fallthru
          _
      $region12: #{tpu_custom_call.1} parent=5 // pred_fallthru
        _
      %p121 = scmp.lt.s32.totalorder %s14, 2
      // Predicated region
      $region17: #{tpu_custom_call.1} parent=5 // pred_check
        %p122 = pneg %p121
      $region18: #{tpu_custom_call.1} parent=5 // pred_check_branch
        %124 = sbr.rel (%p122) target = $region20
      $region19: #{tpu_custom_call.1} parent=5 // pred_region
        // Predicated region
        $region21: #{tpu_custom_call.1} parent=19 // pred_check
          %p125 = pneg %p48
        $region22: #{tpu_custom_call.1} parent=19 // pred_check_branch
          %127 = sbr.rel (%p125) target = $region24
        $region23: #{tpu_custom_call.1} parent=19 // pred_region
          %s128 = sand.u32 %s38, 1
          %s129 = scalar_lea.sflag [#allocation3], %s128
          %s130 = sand.u32 %s38, 1
          %s131 = smul.addr %s130, 8
          %s132 = scalar_lea.vmem [#allocation2], %s131
          %s133 = smul.u32 2, %s22
          %s135 = ssub.s32 128, 128
          %136 = vsyncadd %s129, %s135
          %s137 = smul.addr %s21, 2
          %s138 = sadd.s32 %s133, %s137
          %s139 = smul.addr %s138, 64
          %s140 = scalar_lea.hbm %s0, %s139
          %s142 = sshll.u32 %s132, 4
          %s143 = int_to_ptr.vmem [resolvable:$true] %s142
          %145 = dma.hbm_to_vmem [thread:$0]  %s140, 128, %s143, %s129
        $region24: #{tpu_custom_call.1} parent=19 // pred_fallthru
          _
      $region20: #{tpu_custom_call.1} parent=5 // pred_fallthru
        _
      %p146 = scmp.le.s32.totalorder 1, %s14
      %p147 = scmp.lt.s32.totalorder %s14, 3
      %p148 = pnand %p146, %p147
      %p149 = pneg %p148
      // Predicated region
      $region25: #{tpu_custom_call.1} parent=5 // pred_check
        _
      $region26: #{tpu_custom_call.1} parent=5 // pred_check_branch
        %151 = sbr.rel (%p148) target = $region28
      $region27: #{tpu_custom_call.1} parent=5 // pred_region
        %s152 = ssub.s32 %s14, 1
        %s153 = sand.u32 %s41, 1
        %s154 = scalar_lea.sflag [#allocation3], %s153
        %s155 = sand.u32 %s41, 1
        %s156 = smul.addr %s155, 8
        %s157 = scalar_lea.vmem [#allocation2], %s156
        // Predicated region
        $region29: #{tpu_custom_call.1} parent=27 // pred_check
          %p158 = pneg %p54
        $region30: #{tpu_custom_call.1} parent=27 // pred_check_branch
          %160 = sbr.rel (%p158) target = $region32
        $region31: #{tpu_custom_call.1} parent=27 // pred_region
          %161 = dma.done %s154, 128
        $region32: #{tpu_custom_call.1} parent=27 // pred_fallthru
          _
        %s162 = sand.u32 %s41, 1
        %s163 = scalar_lea.sflag [#allocation3], %s162
        %s164 = sand.u32 %s41, 1
        %s165 = smul.addr %s164, 8
        %s166 = scalar_lea.vmem [#allocation2], %s165
        %p167 = pneg %p54
        %p168 = pneg %p51
        %p169 = pneg %p75
        %p170 = pneg %p72
        %p171 = pneg %p103
        %p172 = pneg %p100
        %s173 = sand.u32 %s90, 1
        %s174 = scalar_lea.sflag [#allocation4], %s173
        %s175 = sand.u32 %s90, 1
        %s176 = smul.addr %s175, 8
        %s177 = scalar_lea.vmem [#allocation5], %s176
        %s178 = smul.u32 2, %s24
        %s179 = smul.u32 2, %s24
        %v180 = vld [vmem:[%s157] sm:$0xff]
        %v181 = vld [vmem:[%s1] sm:$0xf]
        %v183 = vcombine.high %v180, %v180
        %vm185 = vcmask 1043456
        %v186 = vsel %vm185, %v180, 0.0
        %v187 = vrot.slane %v186, 4
        %v188 = vadd.f32 %v186, %v187
        %v189 = vrot.slane %v188, 2
        %v190 = vadd.f32 %v188, %v189
        %v191 = vrot.slane %v190, 1
        %v192 = vadd.f32 %v190, %v191
        %v193 = vsel %vm185, %v183, 0.0
        %v194 = vrot.slane %v193, 4
        %v195 = vadd.f32 %v193, %v194
        %v196 = vrot.slane %v195, 2
        %v197 = vadd.f32 %v195, %v196
        %v198 = vrot.slane %v197, 1
        %v199 = vadd.f32 %v197, %v198
        %v200 = vrcp.pop 4.0
        %v201 = vmul.f32 %v192, %v200
        %v202 = vmul.f32 %v199, %v200
        %v205 = vcombine.low %v201, %v202
        %v207 = vsub.f32 %v180, %v205
        %v208 = vmul.f32 %v207, %v207
        %v210 = vcombine.high %v208, %v208
        %v212 = vsel %vm185, %v208, 0.0
        %v213 = vrot.slane %v212, 4
        %v214 = vadd.f32 %v212, %v213
        %v215 = vrot.slane %v214, 2
        %v216 = vadd.f32 %v214, %v215
        %v217 = vrot.slane %v216, 1
        %v218 = vadd.f32 %v216, %v217
        %v219 = vsel %vm185, %v210, 0.0
        %v220 = vrot.slane %v219, 4
        %v221 = vadd.f32 %v219, %v220
        %v222 = vrot.slane %v221, 2
        %v223 = vadd.f32 %v221, %v222
        %v224 = vrot.slane %v223, 1
        %v225 = vadd.f32 %v223, %v224
        %v226 = vmul.f32 %v218, %v200
        %v227 = vmul.f32 %v225, %v200
        %v228 = vadd.f32 %v226, 1e-05
        %v229 = vadd.f32 %v227, 1e-05
        %v230 = vrsqrt.pop %v228
        %v231 = vrsqrt.pop %v229
        %233 = vset.pattern.permute.xlu0 0
        %234 = vperm.xlu0 %233, %v181
        %v235 = vpop.permute.xlu0 %234
        %v237 = vmul.f32 %v230, %v235
        %v238 = vmul.f32 %v231, %v235
        %v241 = vcombine.low %v237, %v238
        %v243 = vmul.f32 %v180, %v241
        %244 = vst [vmem:[%s177] sm:$0xff] %v243
        %s245 = sand.u32 %s90, 1
        %s246 = scalar_lea.sflag [#allocation4], %s245
        %s247 = sand.u32 %s90, 1
        %s248 = smul.addr %s247, 8
        %s249 = scalar_lea.vmem [#allocation5], %s248
        // Predicated region
        $region33: #{tpu_custom_call.1} parent=27 // pred_check
          %p250 = pneg %p100
        $region34: #{tpu_custom_call.1} parent=27 // pred_check_branch
          %252 = sbr.rel (%p250) target = $region36
        $region35: #{tpu_custom_call.1} parent=27 // pred_region
          %s253 = smul.u32 2, %s24
          %s255 = ssub.s32 128, 128
          %256 = vsyncadd %s246, %s255
          %s257 = smul.addr %s23, 2
          %s258 = sadd.s32 %s253, %s257
          %s259 = smul.addr %s258, 64
          %s260 = scalar_lea.hbm %s2, %s259
          %s262 = sshll.u32 %s249, 4
          %s263 = int_to_ptr.vmem [resolvable:$true] %s262
          %265 = dma.vmem_to_hbm [thread:$0]  %s263, 128, %s260, %s246
        $region36: #{tpu_custom_call.1} parent=27 // pred_fallthru
          _
      $region28: #{tpu_custom_call.1} parent=5 // pred_fallthru
        _
      %p266 = scmp.le.s32.totalorder 2, %s14
      // Predicated region
      $region37: #{tpu_custom_call.1} parent=5 // pred_check
        %p267 = pneg %p266
      $region38: #{tpu_custom_call.1} parent=5 // pred_check_branch
        %269 = sbr.rel (%p267) target = $region40
      $region39: #{tpu_custom_call.1} parent=5 // pred_region
        %s270 = ssub.s32 %s14, 2
        // Predicated region
        $region41: #{tpu_custom_call.1} parent=39 // pred_check
          %p271 = pneg %p106
        $region42: #{tpu_custom_call.1} parent=39 // pred_check_branch
          %273 = sbr.rel (%p271) target = $region44
        $region43: #{tpu_custom_call.1} parent=39 // pred_region
          %s274 = sand.u32 %s91, 1
          %s275 = scalar_lea.sflag [#allocation4], %s274
          %s276 = sand.u32 %s91, 1
          %s277 = smul.addr %s276, 8
          %s278 = scalar_lea.vmem [#allocation5], %s277
          %279 = dma.done %s275, 128
        $region44: #{tpu_custom_call.1} parent=39 // pred_fallthru
          _
      $region40: #{tpu_custom_call.1} parent=5 // pred_fallthru
        _
    $region6: #{tpu_custom_call.1} parent=1 // loop_footer
      %s18 = sadd.s32 1, %s14
    $region7: #{tpu_custom_call.1} parent=1 // loop_footer_branch
      %13 = sbr.rel target = $region3
    $region8: #{tpu_custom_call.1} parent=1 // loop_exit
      _
    %280 = vsyncpa [#allocation3], 1
    %s281 = scalar_lea.sflag [#allocation3], 1
    %282 = vsyncpa %s281, 1
    %283 = vsyncpa [#allocation4], 1
    %s284 = scalar_lea.sflag [#allocation4], 1
    %285 = vsyncpa %s284, 1

</llo_original>
